<compile_context>
chip_gen: v7x
topology: tpu7x:2x2x1
jax: 0.10.0
libtpu: 0.0.40
codegen_flags: <defaults>
</compile_context>

<pallas_src>
import functools

import jax
import jax.numpy as jnp
from jax import lax
from jax.experimental import pallas as pl
from jax.experimental.pallas import tpu as pltpu


def _leaky_relu(x, slope=0.2):
    return jnp.where(x > 0, x, slope * x)


def discriminator_kernel(x_ref, w_ref, m_ref, o_ref, *, in_dim, hid, hid2):
    """Fused 4-layer MLP forward for one batch tile.

    x_ref : (block_b, in_dim)          -- natural layout, batch on sublanes
    w_ref : (hid, in_dim + hid + hid2) -- [W1 | W2 | W3^T], PyTorch (out, in) layout
    m_ref : (hid, 5)                   -- [b1 | b2 | b3(pad) | w4(pad) | b4(pad)] columns
    o_ref : (1, block_b)               -- lane-dense output row
    """
    x = x_ref[...].astype(jnp.float32)                       # (block_b, in_dim)
    m = m_ref[...]                                            # (hid, 5)
    b1 = m[:, 0:1]
    b2 = m[:, 1:2]
    b3 = m[:hid2, 2:3]
    w4 = m[:hid2, 3:4]
    b4 = m[0:1, 4:5]

    # Layer 1: contract in_dim of W1 (hid, in) with in_dim of x (block_b, in)
    # -> transposed activation (hid, block_b); batch lands on lanes.  (MXU)
    h = lax.dot_general(w_ref[:, :in_dim], x,
                        (((1,), (1,)), ((), ())),
                        preferred_element_type=jnp.float32) + b1
    h = _leaky_relu(h)

    # Layer 2: Linear(hid -> hid) + LeakyReLU(0.2)  (MXU)
    h = jnp.dot(w_ref[:, in_dim:in_dim + hid], h,
                preferred_element_type=jnp.float32) + b2
    h = _leaky_relu(h)

    # Layer 3: W3 is stored transposed in the slab; contract the hid axis of
    # both operands -> (hid2, block_b).  (MXU)
    h = lax.dot_general(w_ref[:, in_dim + hid:in_dim + hid + hid2], h,
                        (((0,), (0,)), ((), ())),
                        preferred_element_type=jnp.float32) + b3
    h = _leaky_relu(h)

    # Layer 4: Linear(hid2 -> 1) as VPU multiply + sublane (XLU) reduce;
    # avoids a degenerate N=1 MXU matmul.
    z = jnp.sum(h * w4, axis=0, keepdims=True) + b4           # (1, block_b)

    # Numerically-stable sigmoid:  z>=0: 1/(1+e^-z),  z<0: e^z/(1+e^z).
    ez = jnp.exp(-jnp.abs(z))                # EUP; always in (0, 1], no inf
    r = 1.0 / (1.0 + ez)                     # exact divide (vrcp + refinement on EUP)
    o_ref[...] = jnp.where(z >= 0, r, ez * r).astype(o_ref.dtype)


def pack_params(params):
    """One-time packing of PyTorch-layout params into two VMEM slabs.

    Called outside the hot path (amortized across forward calls).
    """
    (w1, b1), (w2, b2), (w3, b3), (w4, b4) = params   # w: (out, in), b: (out,)
    hid = w1.shape[0]

    # Weight slab: [W1 (hid,in) | W2 (hid,hid) | W3^T (hid,hid2)]
    w_slab = jnp.concatenate([w1, w2, w3.T], axis=1).astype(jnp.float32)

    def col(v):
        v = jnp.asarray(v, jnp.float32).reshape(-1, 1)
        return jnp.pad(v, ((0, hid - v.shape[0]), (0, 0)))

    # Misc slab columns: b1 | b2 | b3 (padded) | w4 vector (padded) | b4 (padded)
    m_slab = jnp.concatenate(
        [col(b1), col(b2), col(b3), col(w4.reshape(-1)), col(b4)], axis=1)
    return w_slab, m_slab


def _round_up(x, m):
    return ((x + m - 1) // m) * m


def _num_tensorcores():
    """Best-effort TensorCore count per chip (v7x / megacore -> 2, else 1)."""
    try:
        dev = jax.devices()[0]
    except Exception:
        return 1
    kind = str(getattr(dev, "device_kind", "") or "").lower()
    if "v7" in kind:
        return 2
    try:
        nc = int(getattr(dev, "num_cores", 1) or 1)
    except (TypeError, ValueError):
        nc = 1
    return max(1, nc)


def pick_block_b(batch, num_tc=None):
    """Per-chip batch tile: 1 grid step on 1-TC chips, >=1 tile per TC otherwise."""
    if num_tc is None:
        num_tc = _num_tensorcores()
    bp = _round_up(batch, 128)                      # lane granularity
    if num_tc >= 2 and bp >= num_tc * 128:
        block_b = _round_up(-(-bp // num_tc), 128)  # split across TensorCores
    else:
        block_b = bp                                # single serial step
    return int(max(128, min(block_b, 1024)))        # cap for vreg pressure


@functools.partial(jax.jit, static_argnames=("block_b",))
def discriminator_forward(x, w_slab, m_slab, *, block_b=256):
    """x: (B, input_size) float32, packed slabs -> (B, 1) float32."""
    B, in_dim = x.shape
    hid = w_slab.shape[0]
    hid2 = w_slab.shape[1] - in_dim - hid
    n_tiles = pl.cdiv(B, block_b)

    kernel = functools.partial(discriminator_kernel,
                               in_dim=in_dim, hid=hid, hid2=hid2)

    out = pl.pallas_call(
        kernel,
        out_shape=jax.ShapeDtypeStruct((1, B), jnp.float32),
        grid=(n_tiles,),
        in_specs=[
            # x tile in natural layout; ragged last block is masked by Pallas.
            pl.BlockSpec((block_b, in_dim), lambda i: (i, 0)),
            # Slabs: full-array blocks with constant index_map -> VMEM-resident.
            pl.BlockSpec(w_slab.shape, lambda i: (0, 0)),
            pl.BlockSpec(m_slab.shape, lambda i: (0, 0)),
        ],
        out_specs=pl.BlockSpec((1, block_b), lambda i: (0, i)),  # lane-dense row
        compiler_params=pltpu.CompilerParams(
            dimension_semantics=("parallel",)),                  # megacore on v7x
    )(x, w_slab, m_slab)

    return out.reshape(B, 1)


def init_params(key, input_size, hidden_size):
    """Xavier-uniform-style init. Weights in PyTorch (fan_out, fan_in) layout."""
    dims = [(input_size, hidden_size),
            (hidden_size, hidden_size),
            (hidden_size, hidden_size // 2),
            (hidden_size // 2, 1)]
    keys = jax.random.split(key, 2 * len(dims))
    params = []
    for idx, (fi, fo) in enumerate(dims):
        bound = (6.0 / (fi + fo)) ** 0.5
        w = jax.random.uniform(keys[2 * idx], (fo, fi), jnp.float32, -bound, bound)
        b = 0.01 * jax.random.normal(keys[2 * idx + 1], (fo,), jnp.float32)
        params.append((w, b))
    return params


def reference_forward(x, params):
    """Pure-JAX reference of the same MLP (PyTorch layout) for the check."""
    h = x
    for li, (w, b) in enumerate(params):
        h = h @ w.T + b
        if li < 3:
            h = jnp.where(h > 0, h, 0.2 * h)
        else:
            h = jax.nn.sigmoid(h)
    return h


if __name__ == "__main__":
    input_size = 16
    hidden_size = 32
    batch = 400   # not a multiple of 128 -> exercises Pallas ragged-block masking

    key = jax.random.PRNGKey(0)
    k_x, k_p = jax.random.split(key)
    x = jax.random.normal(k_x, (batch, input_size), jnp.float32)
    params = init_params(k_p, input_size, hidden_size)

    # One-time parameter packing (off the per-call hot path).
    w_slab, m_slab = pack_params(params)
    w_slab, m_slab = jax.block_until_ready((w_slab, m_slab))

    block_b = pick_block_b(batch)   # 512 (1 step) on v5e/v6e, 256 (2 steps) on v7x

    out = discriminator_forward(x, w_slab, m_slab, block_b=block_b)
    out = jax.block_until_ready(out)

    ref = reference_forward(x, params)
    assert out.shape == (batch, 1), out.shape
    max_err = float(jnp.max(jnp.abs(out - ref)))
    assert max_err < 1e-4, f"mismatch vs reference: max abs err = {max_err}"

    print("KERNEL_OK")
</pallas_src>

<mosaic_0001>
module attributes {stable_mosaic.version = 11 : i64} {
  func.func @discriminator_kernel(%arg0: i32, %arg1: memref<512x16xf32, #tpu.memory_space<vmem>>, %arg2: memref<32x64xf32, #tpu.memory_space<vmem>>, %arg3: memref<32x5xf32, #tpu.memory_space<vmem>>, %arg4: memref<1x512xf32, #tpu.memory_space<vmem>>) attributes {dimension_semantics = [#tpu.dimension_semantics<parallel>], iteration_bounds = array<i64: 1>, scalar_prefetch = 0 : i64, scratch_operands = 0 : i64, tpu.core_type = #tpu.core_type<tc>, window_params = [{transform_indices = @transform_0, window_bounds = array<i64: 512, 16>}, {pipeline_mode = #tpu.pipeline_mode<synchronous>, transform_indices = @transform_1, window_bounds = array<i64: 32, 64>}, {pipeline_mode = #tpu.pipeline_mode<synchronous>, transform_indices = @transform_2, window_bounds = array<i64: 32, 5>}, {transform_indices = @transform_3, window_bounds = array<i64: 1, 512>}]} {
    %c0 = arith.constant 0 : index
    %c0_0 = arith.constant 0 : index
    %0 = vector.load %arg1[%c0, %c0_0] : memref<512x16xf32, #tpu.memory_space<vmem>>, vector<512x16xf32>
    %c0_1 = arith.constant 0 : index
    %c0_2 = arith.constant 0 : index
    %1 = vector.load %arg3[%c0_1, %c0_2] : memref<32x5xf32, #tpu.memory_space<vmem>>, vector<32x5xf32>
    %2 = vector.extract_strided_slice %1 {offsets = [0, 0], sizes = [32, 1], strides = [1, 1]} : vector<32x5xf32> to vector<32x1xf32>
    %3 = vector.extract_strided_slice %1 {offsets = [0, 1], sizes = [32, 1], strides = [1, 1]} : vector<32x5xf32> to vector<32x1xf32>
    %4 = vector.extract_strided_slice %1 {offsets = [0, 2], sizes = [16, 1], strides = [1, 1]} : vector<32x5xf32> to vector<16x1xf32>
    %5 = vector.extract_strided_slice %1 {offsets = [0, 3], sizes = [16, 1], strides = [1, 1]} : vector<32x5xf32> to vector<16x1xf32>
    %6 = vector.extract_strided_slice %1 {offsets = [0, 4], sizes = [1, 1], strides = [1, 1]} : vector<32x5xf32> to vector<1x1xf32>
    %c0_3 = arith.constant 0 : index
    %c0_4 = arith.constant 0 : index
    %7 = vector.load %arg2[%c0_3, %c0_4] : memref<32x64xf32, #tpu.memory_space<vmem>>, vector<32x16xf32>
    %cst = arith.constant dense<0.000000e+00> : vector<32x512xf32>
    %8 = tpu.matmul %7, %0, %cst {dimension_numbers = #tpu.dot_dimension_numbers<[1], [1], [0], [0], [0, 0, 1, 0], [], []>} : vector<32x16xf32>, vector<512x16xf32>, vector<32x512xf32> -> vector<32x512xf32>
    %9 = vector.broadcast %2 : vector<32x1xf32> to vector<32x512xf32>
    %10 = arith.addf %8, %9 : vector<32x512xf32>
    %cst_5 = arith.constant 0.000000e+00 : f32
    %11 = vector.broadcast %cst_5 : f32 to vector<32x512xf32>
    %12 = arith.cmpf ogt, %10, %11 : vector<32x512xf32>
    %cst_6 = arith.constant 2.000000e-01 : f32
    %13 = vector.broadcast %cst_6 : f32 to vector<32x512xf32>
    %14 = arith.mulf %13, %10 : vector<32x512xf32>
    %15 = arith.select %12, %10, %14 : vector<32x512xi1>, vector<32x512xf32>
    %c0_7 = arith.constant 0 : index
    %c16 = arith.constant 16 : index
    %16 = vector.load %arg2[%c0_7, %c16] : memref<32x64xf32, #tpu.memory_space<vmem>>, vector<32x32xf32>
    %cst_8 = arith.constant dense<0.000000e+00> : vector<32x512xf32>
    %17 = tpu.matmul %16, %15, %cst_8 {dimension_numbers = #tpu.dot_dimension_numbers<[1], [0], [0], [1], [0, 0, 1, 1], [], []>} : vector<32x32xf32>, vector<32x512xf32>, vector<32x512xf32> -> vector<32x512xf32>
    %18 = vector.broadcast %3 : vector<32x1xf32> to vector<32x512xf32>
    %19 = arith.addf %17, %18 : vector<32x512xf32>
    %cst_9 = arith.constant 0.000000e+00 : f32
    %20 = vector.broadcast %cst_9 : f32 to vector<32x512xf32>
    %21 = arith.cmpf ogt, %19, %20 : vector<32x512xf32>
    %cst_10 = arith.constant 2.000000e-01 : f32
    %22 = vector.broadcast %cst_10 : f32 to vector<32x512xf32>
    %23 = arith.mulf %22, %19 : vector<32x512xf32>
    %24 = arith.select %21, %19, %23 : vector<32x512xi1>, vector<32x512xf32>
    %c0_11 = arith.constant 0 : index
    %c48 = arith.constant 48 : index
    %25 = vector.load %arg2[%c0_11, %c48] : memref<32x64xf32, #tpu.memory_space<vmem>>, vector<32x16xf32>
    %cst_12 = arith.constant dense<0.000000e+00> : vector<16x512xf32>
    %26 = tpu.matmul %25, %24, %cst_12 {dimension_numbers = #tpu.dot_dimension_numbers<[0], [0], [1], [1], [0, 1, 1, 1], [], []>} : vector<32x16xf32>, vector<32x512xf32>, vector<16x512xf32> -> vector<16x512xf32>
    %27 = vector.broadcast %4 : vector<16x1xf32> to vector<16x512xf32>
    %28 = arith.addf %26, %27 : vector<16x512xf32>
    %cst_13 = arith.constant 0.000000e+00 : f32
    %29 = vector.broadcast %cst_13 : f32 to vector<16x512xf32>
    %30 = arith.cmpf ogt, %28, %29 : vector<16x512xf32>
    %cst_14 = arith.constant 2.000000e-01 : f32
    %31 = vector.broadcast %cst_14 : f32 to vector<16x512xf32>
    %32 = arith.mulf %31, %28 : vector<16x512xf32>
    %33 = arith.select %30, %28, %32 : vector<16x512xi1>, vector<16x512xf32>
    %34 = vector.broadcast %5 : vector<16x1xf32> to vector<16x512xf32>
    %35 = arith.mulf %33, %34 : vector<16x512xf32>
    %cst_15 = arith.constant dense<0.000000e+00> : vector<512xf32>
    %36 = vector.multi_reduction <add>, %35, %cst_15 [0] : vector<16x512xf32> to vector<512xf32>
    %37 = vector.shape_cast %36 : vector<512xf32> to vector<1x512xf32>
    %38 = vector.broadcast %6 : vector<1x1xf32> to vector<1x512xf32>
    %39 = arith.addf %37, %38 : vector<1x512xf32>
    %40 = math.absf %39 : vector<1x512xf32>
    %cst_16 = arith.constant 0.000000e+00 : f32
    %41 = vector.broadcast %cst_16 : f32 to vector<1x512xf32>
    %42 = arith.subf %41, %40 : vector<1x512xf32>
    %43 = math.exp %42 : vector<1x512xf32>
    %cst_17 = arith.constant 1.000000e+00 : f32
    %44 = vector.broadcast %cst_17 : f32 to vector<1x512xf32>
    %45 = arith.addf %44, %43 : vector<1x512xf32>
    %cst_18 = arith.constant 1.000000e+00 : f32
    %46 = vector.broadcast %cst_18 : f32 to vector<1x512xf32>
    %47 = arith.divf %46, %45 : vector<1x512xf32>
    %cst_19 = arith.constant 0.000000e+00 : f32
    %48 = vector.broadcast %cst_19 : f32 to vector<1x512xf32>
    %49 = arith.cmpf oge, %39, %48 : vector<1x512xf32>
    %50 = arith.mulf %43, %47 : vector<1x512xf32>
    %51 = arith.select %49, %47, %50 : vector<1x512xi1>, vector<1x512xf32>
    %c0_20 = arith.constant 0 : index
    %c0_21 = arith.constant 0 : index
    %52 = vector.load %arg4[%c0_20, %c0_21] : memref<1x512xf32, #tpu.memory_space<vmem>>, vector<1x512xf32>
    tpu.vector_store %arg4[%c0_20, %c0_21], %51 {strides = array<i32>} : memref<1x512xf32, #tpu.memory_space<vmem>>, vector<1x512xf32>,
    return
  }
  func.func @transform_0(%arg0: i32) -> (i32, i32) {
    %c0_i32 = arith.constant 0 : i32
    %c0_i32_0 = arith.constant 0 : i32
    return %arg0, %c0_i32 : i32, i32
  }
  func.func @transform_1(%arg0: i32) -> (i32, i32) {
    %c0_i32 = arith.constant 0 : i32
    %c0_i32_0 = arith.constant 0 : i32
    %c0_i32_1 = arith.constant 0 : i32
    return %c0_i32, %c0_i32_0 : i32, i32
  }
  func.func @transform_2(%arg0: i32) -> (i32, i32) {
    %c0_i32 = arith.constant 0 : i32
    %c0_i32_0 = arith.constant 0 : i32
    %c0_i32_1 = arith.constant 0 : i32
    return %c0_i32, %c0_i32_0 : i32, i32
  }
  func.func @transform_3(%arg0: i32) -> (i32, i32) {
    %c0_i32 = arith.constant 0 : i32
    %c0_i32_0 = arith.constant 0 : i32
    return %c0_i32, %arg0 : i32, i32
  }
}

</mosaic_0001>

<llo_original>
// kernel: discriminator_forward.1
$region0: #{discriminator_forward.1}
  #allocation0 [shape = 'u32[]', space=smem, size = 0x4, offset = 0x4, fixed_abs, tag = 'smem constant byte address 0x4 - core index']
  #allocation1 [shape = 'u32[144,128]{1,0:T(1,128)}', space=vmem, size = 0x12000, scoped, tag = 'internal scratch']
  %s0 = inlined_call_operand.vmem [shape: f32[400,16], index: 0, kind: input, shape index: {}]
  %s1 = inlined_call_operand.vmem [shape: f32[32,64], index: 1, kind: input, shape index: {}]
  %s2 = inlined_call_operand.vmem [shape: f32[32,5], index: 2, kind: input, shape index: {}]
  %s3 = inlined_call_operand.hbm [shape: f32[1,400], index: 3, kind: output, shape index: {}]
  %s4 = sld [smem:[#allocation0]]
  $region22: #{discriminator_forward.1} parent=0
    _
  %s6 = ssub.s32 1, %s4
  %s7 = scalar_select 0, %s6, %s4
  $region1: #{discriminator_forward.1} parent=0
    #allocation2 [shape = 'u8[2048]{0}', space=vmem, size = 0x800, scoped, tag = 'output window, operand 0, single buffered']
    #allocation3 [shape = 's32[1]{0}', space=sflag, size = 0x4, scoped, tag = 'scoped memory for discriminator_forward.1']
    %8 = vsyncpa [#allocation3], 0
    // Predicated region
    $region2: #{discriminator_forward.1} parent=1 // pred_check
      _
    $region3: #{discriminator_forward.1} parent=1 // pred_check_branch
      %10 = sbr.rel (0) target = $region5
    $region4: #{discriminator_forward.1} parent=1 // pred_region
      _
    $region5: #{discriminator_forward.1} parent=1 // pred_fallthru
      _
    // Predicated region
    $region6: #{discriminator_forward.1} parent=1 // pred_check
      _
    $region7: #{discriminator_forward.1} parent=1 // pred_check_branch
      %12 = sbr.rel (0) target = $region9
    $region8: #{discriminator_forward.1} parent=1 // pred_region
      _
    $region9: #{discriminator_forward.1} parent=1 // pred_fallthru
      _
    // Predicated region
    $region10: #{discriminator_forward.1} parent=1 // pred_check
      _
    $region11: #{discriminator_forward.1} parent=1 // pred_check_branch
      %14 = sbr.rel (0) target = $region13
    $region12: #{discriminator_forward.1} parent=1 // pred_region
      _
    $region13: #{discriminator_forward.1} parent=1 // pred_fallthru
      _
    %v15 = vld [vmem:[%s0] sm:$0xff]
    %v16 = vld [vmem:[%s0 + $0x8] sm:$0xff]
    %v17 = vld [vmem:[%s0 + $0x10] sm:$0xff]
    %v18 = vld [vmem:[%s0 + $0x18] sm:$0xff]
    %v19 = vld [vmem:[%s0 + $0x20] sm:$0xff]
    %v20 = vld [vmem:[%s0 + $0x28] sm:$0xff]
    %v21 = vld [vmem:[%s0 + $0x30] sm:$0xff]
    %v22 = vld [vmem:[%s0 + $0x38] sm:$0xff]
    %v23 = vld [vmem:[%s0 + $0x40] sm:$0xff]
    %v24 = vld [vmem:[%s0 + $0x48] sm:$0xff]
    %v25 = vld [vmem:[%s0 + $0x50] sm:$0xff]
    %v26 = vld [vmem:[%s0 + $0x58] sm:$0xff]
    %v27 = vld [vmem:[%s0 + $0x60] sm:$0xff]
    %v28 = vld [vmem:[%s0 + $0x68] sm:$0xff]
    %v29 = vld [vmem:[%s0 + $0x70] sm:$0xff]
    %v30 = vld [vmem:[%s0 + $0x78] sm:$0xff]
    %v31 = vld [vmem:[%s0 + $0x80] sm:$0xff]
    %v32 = vld [vmem:[%s0 + $0x88] sm:$0xff]
    %v33 = vld [vmem:[%s0 + $0x90] sm:$0xff]
    %v34 = vld [vmem:[%s0 + $0x98] sm:$0xff]
    %v35 = vld [vmem:[%s0 + $0xa0] sm:$0xff]
    %v36 = vld [vmem:[%s0 + $0xa8] sm:$0xff]
    %v37 = vld [vmem:[%s0 + $0xb0] sm:$0xff]
    %v38 = vld [vmem:[%s0 + $0xb8] sm:$0xff]
    %v39 = vld [vmem:[%s0 + $0xc0] sm:$0xff]
    %v40 = vld [vmem:[%s0 + $0xc8] sm:$0xff]
    %v41 = vld [vmem:[%s0 + $0xd0] sm:$0xff]
    %v42 = vld [vmem:[%s0 + $0xd8] sm:$0xff]
    %v43 = vld [vmem:[%s0 + $0xe0] sm:$0xff]
    %v44 = vld [vmem:[%s0 + $0xe8] sm:$0xff]
    %v45 = vld [vmem:[%s0 + $0xf0] sm:$0xff]
    %v46 = vld [vmem:[%s0 + $0xf8] sm:$0xff]
    %v47 = vld [vmem:[%s0 + $0x100] sm:$0xff]
    %v48 = vld [vmem:[%s0 + $0x108] sm:$0xff]
    %v49 = vld [vmem:[%s0 + $0x110] sm:$0xff]
    %v50 = vld [vmem:[%s0 + $0x118] sm:$0xff]
    %v51 = vld [vmem:[%s0 + $0x120] sm:$0xff]
    %v52 = vld [vmem:[%s0 + $0x128] sm:$0xff]
    %v53 = vld [vmem:[%s0 + $0x130] sm:$0xff]
    %v54 = vld [vmem:[%s0 + $0x138] sm:$0xff]
    %v55 = vld [vmem:[%s0 + $0x140] sm:$0xff]
    %v56 = vld [vmem:[%s0 + $0x148] sm:$0xff]
    %v57 = vld [vmem:[%s0 + $0x150] sm:$0xff]
    %v58 = vld [vmem:[%s0 + $0x158] sm:$0xff]
    %v59 = vld [vmem:[%s0 + $0x160] sm:$0xff]
    %v60 = vld [vmem:[%s0 + $0x168] sm:$0xff]
    %v61 = vld [vmem:[%s0 + $0x170] sm:$0xff]
    %v62 = vld [vmem:[%s0 + $0x178] sm:$0xff]
    %v63 = vld [vmem:[%s0 + $0x180] sm:$0xff]
    %v64 = vld [vmem:[%s0 + $0x188] sm:$0xff]
    %v65 = vld [vmem:[%s0 + $0x190] sm:$0xff]
    %v66 = vld [vmem:[%s0 + $0x198] sm:$0xff]
    %v67 = vld [vmem:[%s0 + $0x1a0] sm:$0xff]
    %v68 = vld [vmem:[%s0 + $0x1a8] sm:$0xff]
    %v69 = vld [vmem:[%s0 + $0x1b0] sm:$0xff]
    %v70 = vld [vmem:[%s0 + $0x1b8] sm:$0xff]
    %v71 = vld [vmem:[%s0 + $0x1c0] sm:$0xff]
    %v72 = vld [vmem:[%s0 + $0x1c8] sm:$0xff]
    %v73 = vld [vmem:[%s0 + $0x1d0] sm:$0xff]
    %v74 = vld [vmem:[%s0 + $0x1d8] sm:$0xff]
    %v75 = vld [vmem:[%s0 + $0x1e0] sm:$0xff]
    %v76 = vld [vmem:[%s0 + $0x1e8] sm:$0xff]
    %v77 = vld [vmem:[%s0 + $0x1f0] sm:$0xff]
    %v78 = vld [vmem:[%s0 + $0x1f8] sm:$0xff]
    %v79 = vld [vmem:[%s2] sm:$0xff]
    %v80 = vld [vmem:[%s2 + $0x8] sm:$0xff]
    %v81 = vld [vmem:[%s2 + $0x10] sm:$0xff]
    %v82 = vld [vmem:[%s2 + $0x18] sm:$0xff]
    %v83 = vld [vmem:[%s1] sm:$0xff]
    %v84 = vld [vmem:[%s1 + $0x8] sm:$0xff]
    %v85 = vld [vmem:[%s1 + $0x10] sm:$0xff]
    %v86 = vld [vmem:[%s1 + $0x18] sm:$0xff]
    %88 = vset.pattern.permute.xlu0 0
    %89 = vperm.xlu0 %88, %v79
    %v90 = vpop.permute.xlu0 %89
    %93 = vset.pattern.permute.xlu0 0
    %94 = vperm.xlu0 %93, %v80
    %v95 = vpop.permute.xlu0 %94
    %98 = vset.pattern.permute.xlu0 0
    %99 = vperm.xlu0 %98, %v81
    %v100 = vpop.permute.xlu0 %99
    %103 = vset.pattern.permute.xlu0 0
    %104 = vperm.xlu0 %103, %v82
    %v105 = vpop.permute.xlu0 %104
    %vm107 = vcmask 130048
    %v109 = vsel %vm107, %v83, 0
    %v112 = vsel %vm107, %v84, 0
    %v115 = vsel %vm107, %v85, 0
    %v118 = vsel %vm107, %v86, 0
    %v121 = vsel %vm107, %v15, 0
    %v124 = vsel %vm107, %v16, 0
    %v127 = vsel %vm107, %v17, 0
    %v130 = vsel %vm107, %v18, 0
    %v133 = vsel %vm107, %v19, 0
    %v136 = vsel %vm107, %v20, 0
    %v139 = vsel %vm107, %v21, 0
    %v142 = vsel %vm107, %v22, 0
    %v145 = vsel %vm107, %v23, 0
    %v148 = vsel %vm107, %v24, 0
    %v151 = vsel %vm107, %v25, 0
    %v154 = vsel %vm107, %v26, 0
    %v157 = vsel %vm107, %v27, 0
    %v160 = vsel %vm107, %v28, 0
    %v163 = vsel %vm107, %v29, 0
    %v166 = vsel %vm107, %v30, 0
    %v169 = vsel %vm107, %v31, 0
    %v172 = vsel %vm107, %v32, 0
    %v175 = vsel %vm107, %v33, 0
    %v178 = vsel %vm107, %v34, 0
    %v181 = vsel %vm107, %v35, 0
    %v184 = vsel %vm107, %v36, 0
    %v187 = vsel %vm107, %v37, 0
    %v190 = vsel %vm107, %v38, 0
    %v193 = vsel %vm107, %v39, 0
    %v196 = vsel %vm107, %v40, 0
    %v199 = vsel %vm107, %v41, 0
    %v202 = vsel %vm107, %v42, 0
    %v205 = vsel %vm107, %v43, 0
    %v208 = vsel %vm107, %v44, 0
    %v211 = vsel %vm107, %v45, 0
    %v214 = vsel %vm107, %v46, 0
    %v217 = vsel %vm107, %v47, 0
    %v220 = vsel %vm107, %v48, 0
    %v223 = vsel %vm107, %v49, 0
    %v226 = vsel %vm107, %v50, 0
    %v229 = vsel %vm107, %v51, 0
    %v232 = vsel %vm107, %v52, 0
    %v235 = vsel %vm107, %v53, 0
    %v238 = vsel %vm107, %v54, 0
    %v241 = vsel %vm107, %v55, 0
    %v244 = vsel %vm107, %v56, 0
    %v247 = vsel %vm107, %v57, 0
    %v250 = vsel %vm107, %v58, 0
    %v253 = vsel %vm107, %v59, 0
    %v256 = vsel %vm107, %v60, 0
    %v259 = vsel %vm107, %v61, 0
    %v262 = vsel %vm107, %v62, 0
    %v265 = vsel %vm107, %v63, 0
    %v268 = vsel %vm107, %v64, 0
    %v271 = vsel %vm107, %v65, 0
    %v274 = vsel %vm107, %v66, 0
    %v277 = vsel %vm107, %v67, 0
    %v280 = vsel %vm107, %v68, 0
    %v283 = vsel %vm107, %v69, 0
    %v286 = vsel %vm107, %v70, 0
    %v289 = vsel %vm107, %v71, 0
    %v292 = vsel %vm107, %v72, 0
    %v295 = vsel %vm107, %v73, 0
    %v298 = vsel %vm107, %v74, 0
    %v301 = vsel %vm107, %v75, 0
    %v304 = vsel %vm107, %v76, 0
    %v307 = vsel %vm107, %v77, 0
    %v310 = vsel %vm107, %v78, 0
    %312 = vmatprep.subr.mxu0 0.0
    %313 = vmatpush1.xpose.msra.mxu0 %v121
    %314 = vmatprep.subr.mxu0 0.0
    %315 = vmatpush1.xpose.msra.mxu0 %v124
    %316 = vmatprep.subr.mxu0 0.0
    %317 = vmatpush1.xpose.msra.mxu0 %v127
    %318 = vmatprep.subr.mxu0 0.0
    %319 = vmatpush1.xpose.msra.mxu0 %v130
    %320 = vmatprep.subr.mxu0 0.0
    %321 = vmatpush1.xpose.msra.mxu0 %v133
    %322 = vmatprep.subr.mxu0 0.0
    %323 = vmatpush1.xpose.msra.mxu0 %v136
    %324 = vmatprep.subr.mxu0 0.0
    %325 = vmatpush1.xpose.msra.mxu0 %v139
    %326 = vmatprep.subr.mxu0 0.0
    %327 = vmatpush1.xpose.msra.mxu0 %v142
    %328 = vmatprep.subr.mxu0 0.0
    %329 = vmatpush1.xpose.msra.mxu0 %v145
    %330 = vmatprep.subr.mxu0 0.0
    %331 = vmatpush1.xpose.msra.mxu0 %v148
    %332 = vmatprep.subr.mxu0 0.0
    %333 = vmatpush1.xpose.msra.mxu0 %v151
    %334 = vmatprep.subr.mxu0 0.0
    %335 = vmatpush1.xpose.msra.mxu0 %v154
    %336 = vmatprep.subr.mxu0 0.0
    %337 = vmatpush1.xpose.msra.mxu0 %v157
    %338 = vmatprep.subr.mxu0 0.0
    %339 = vmatpush1.xpose.msra.mxu0 %v160
    %340 = vmatprep.subr.mxu0 0.0
    %341 = vmatpush1.xpose.msra.mxu0 %v163
    %342 = vmatprep.subr.mxu0 0.0
    %343 = vmatpush1.xpose.msra.mxu0 %v166
    %344 = vmatprep.subr.mxu0 0.0
    %345 = vmatpush1.xpose.msra.mxu0 %v169
    %346 = vmatprep.subr.mxu0 0.0
    %347 = vmatpush1.xpose.msra.mxu0 %v172
    %348 = vmatprep.subr.mxu0 0.0
    %349 = vmatpush1.xpose.msra.mxu0 %v175
    %350 = vmatprep.subr.mxu0 0.0
    %351 = vmatpush1.xpose.msra.mxu0 %v178
    %352 = vmatprep.subr.mxu0 0.0
    %353 = vmatpush1.xpose.msra.mxu0 %v181
    %354 = vmatprep.subr.mxu0 0.0
    %355 = vmatpush1.xpose.msra.mxu0 %v184
    %356 = vmatprep.subr.mxu0 0.0
    %357 = vmatpush1.xpose.msra.mxu0 %v187
    %358 = vmatprep.subr.mxu0 0.0
    %359 = vmatpush1.xpose.msra.mxu0 %v190
    %360 = vmatprep.subr.mxu0 0.0
    %361 = vmatpush1.xpose.msra.mxu0 %v193
    %362 = vmatprep.subr.mxu0 0.0
    %363 = vmatpush1.xpose.msra.mxu0 %v196
    %364 = vmatprep.subr.mxu0 0.0
    %365 = vmatpush1.xpose.msra.mxu0 %v199
    %366 = vmatprep.subr.mxu0 0.0
    %367 = vmatpush1.xpose.msra.mxu0 %v202
    %368 = vmatprep.subr.mxu0 0.0
    %369 = vmatpush1.xpose.msra.mxu0 %v205
    %370 = vmatprep.subr.mxu0 0.0
    %371 = vmatpush1.xpose.msra.mxu0 %v208
    %372 = vmatprep.subr.mxu0 0.0
    %373 = vmatpush1.xpose.msra.mxu0 %v211
    %374 = vmatprep.subr.mxu0 0.0
    %375 = vmatpush1.xpose.msra.mxu0 %v214
    %376 = vmatprep.mubr.f32.mxu0 0.0
    %377 = vmatmul.mubr.f32.gmra.mrb[0].mxu0 %v109
    %v378 = vpop.f32.mrb[0].mxu0
    %v379 = vadd.f32 %v90, %v378
    %v380 = vpop.f32.mrb[0].mxu0
    %v381 = vadd.f32 %v90, %v380
    %382 = vmatprep.mubr.f32.mxu0 0.0
    %383 = vmatmul.mubr.f32.gmra.mrb[0].mxu0 %v112
    %v384 = vpop.f32.mrb[0].mxu0
    %v385 = vadd.f32 %v95, %v384
    %v386 = vpop.f32.mrb[0].mxu0
    %v387 = vadd.f32 %v95, %v386
    %388 = vmatprep.mubr.f32.mxu0 0.0
    %389 = vmatmul.mubr.f32.gmra.mrb[0].mxu0 %v115
    %v390 = vpop.f32.mrb[0].mxu0
    %v391 = vadd.f32 %v100, %v390
    %v392 = vpop.f32.mrb[0].mxu0
    %v393 = vadd.f32 %v100, %v392
    %394 = vmatprep.mubr.f32.mxu0 0.0
    %395 = vmatmul.mubr.f32.gmra.mrb[0].mxu0 %v118
    %v396 = vpop.f32.mrb[0].mxu0
    %v397 = vadd.f32 %v105, %v396
    %v398 = vpop.f32.mrb[0].mxu0
    %v399 = vadd.f32 %v105, %v398
    %400 = vdwg.mxu0
    %401 = vmatprep.subr.mxu0 0.0
    %402 = vmatpush1.xpose.msra.mxu0 %v217
    %403 = vmatprep.subr.mxu0 0.0
    %404 = vmatpush1.xpose.msra.mxu0 %v220
    %405 = vmatprep.subr.mxu0 0.0
    %406 = vmatpush1.xpose.msra.mxu0 %v223
    %407 = vmatprep.subr.mxu0 0.0
    %408 = vmatpush1.xpose.msra.mxu0 %v226
    %409 = vmatprep.subr.mxu0 0.0
    %410 = vmatpush1.xpose.msra.mxu0 %v229
    %411 = vmatprep.subr.mxu0 0.0
    %412 = vmatpush1.xpose.msra.mxu0 %v232
    %413 = vmatprep.subr.mxu0 0.0
    %414 = vmatpush1.xpose.msra.mxu0 %v235
    %415 = vmatprep.subr.mxu0 0.0
    %416 = vmatpush1.xpose.msra.mxu0 %v238
    %417 = vmatprep.subr.mxu0 0.0
    %418 = vmatpush1.xpose.msra.mxu0 %v241
    %419 = vmatprep.subr.mxu0 0.0
    %420 = vmatpush1.xpose.msra.mxu0 %v244
    %421 = vmatprep.subr.mxu0 0.0
    %422 = vmatpush1.xpose.msra.mxu0 %v247
    %423 = vmatprep.subr.mxu0 0.0
    %424 = vmatpush1.xpose.msra.mxu0 %v250
    %425 = vmatprep.subr.mxu0 0.0
    %426 = vmatpush1.xpose.msra.mxu0 %v253
    %427 = vmatprep.subr.mxu0 0.0
    %428 = vmatpush1.xpose.msra.mxu0 %v256
    %429 = vmatprep.subr.mxu0 0.0
    %430 = vmatpush1.xpose.msra.mxu0 %v259
    %431 = vmatprep.subr.mxu0 0.0
    %432 = vmatpush1.xpose.msra.mxu0 %v262
    %433 = vmatprep.subr.mxu0 0.0
    %434 = vmatpush1.xpose.msra.mxu0 %v265
    %435 = vmatprep.subr.mxu0 0.0
    %436 = vmatpush1.xpose.msra.mxu0 %v268
    %437 = vmatprep.subr.mxu0 0.0
    %438 = vmatpush1.xpose.msra.mxu0 %v271
    %439 = vmatprep.subr.mxu0 0.0
    %440 = vmatpush1.xpose.msra.mxu0 %v274
    %441 = vmatprep.subr.mxu0 0.0
    %442 = vmatpush1.xpose.msra.mxu0 %v277
    %443 = vmatprep.subr.mxu0 0.0
    %444 = vmatpush1.xpose.msra.mxu0 %v280
    %445 = vmatprep.subr.mxu0 0.0
    %446 = vmatpush1.xpose.msra.mxu0 %v283
    %447 = vmatprep.subr.mxu0 0.0
    %448 = vmatpush1.xpose.msra.mxu0 %v286
    %449 = vmatprep.subr.mxu0 0.0
    %450 = vmatpush1.xpose.msra.mxu0 %v289
    %451 = vmatprep.subr.mxu0 0.0
    %452 = vmatpush1.xpose.msra.mxu0 %v292
    %453 = vmatprep.subr.mxu0 0.0
    %454 = vmatpush1.xpose.msra.mxu0 %v295
    %455 = vmatprep.subr.mxu0 0.0
    %456 = vmatpush1.xpose.msra.mxu0 %v298
    %457 = vmatprep.subr.mxu0 0.0
    %458 = vmatpush1.xpose.msra.mxu0 %v301
    %459 = vmatprep.subr.mxu0 0.0
    %460 = vmatpush1.xpose.msra.mxu0 %v304
    %461 = vmatprep.subr.mxu0 0.0
    %462 = vmatpush1.xpose.msra.mxu0 %v307
    %463 = vmatprep.subr.mxu0 0.0
    %464 = vmatpush1.xpose.msra.mxu0 %v310
    %465 = vmatprep.mubr.f32.mxu0 0.0
    %466 = vmatmul.mubr.f32.gmra.mrb[0].mxu0 %v109
    %v467 = vpop.f32.mrb[0].mxu0
    %v468 = vadd.f32 %v90, %v467
    %v469 = vpop.f32.mrb[0].mxu0
    %v470 = vadd.f32 %v90, %v469
    %471 = vmatprep.mubr.f32.mxu0 0.0
    %472 = vmatmul.mubr.f32.gmra.mrb[0].mxu0 %v112
    %v473 = vpop.f32.mrb[0].mxu0
    %v474 = vadd.f32 %v95, %v473
    %v475 = vpop.f32.mrb[0].mxu0
    %v476 = vadd.f32 %v95, %v475
    %477 = vmatprep.mubr.f32.mxu0 0.0
    %478 = vmatmul.mubr.f32.gmra.mrb[0].mxu0 %v115
    %v479 = vpop.f32.mrb[0].mxu0
    %v480 = vadd.f32 %v100, %v479
    %v481 = vpop.f32.mrb[0].mxu0
    %v482 = vadd.f32 %v100, %v481
    %483 = vmatprep.mubr.f32.mxu0 0.0
    %484 = vmatmul.mubr.f32.gmra.mrb[0].mxu0 %v118
    %v485 = vpop.f32.mrb[0].mxu0
    %v486 = vadd.f32 %v105, %v485
    %v487 = vpop.f32.mrb[0].mxu0
    %v488 = vadd.f32 %v105, %v487
    %489 = vdwg.mxu0
    %vm490 = vcmp.gt.f32.partialorder %v379, 0.0
    %vm491 = vcmp.gt.f32.partialorder %v381, 0.0
    %vm492 = vcmp.gt.f32.partialorder %v468, 0.0
    %vm493 = vcmp.gt.f32.partialorder %v470, 0.0
    %vm494 = vcmp.gt.f32.partialorder %v385, 0.0
    %vm495 = vcmp.gt.f32.partialorder %v387, 0.0
    %vm496 = vcmp.gt.f32.partialorder %v474, 0.0
    %vm497 = vcmp.gt.f32.partialorder %v476, 0.0
    %vm498 = vcmp.gt.f32.partialorder %v391, 0.0
    %vm499 = vcmp.gt.f32.partialorder %v393, 0.0
    %vm500 = vcmp.gt.f32.partialorder %v480, 0.0
    %vm501 = vcmp.gt.f32.partialorder %v482, 0.0
    %vm502 = vcmp.gt.f32.partialorder %v397, 0.0
    %vm503 = vcmp.gt.f32.partialorder %v399, 0.0
    %vm504 = vcmp.gt.f32.partialorder %v486, 0.0
    %vm505 = vcmp.gt.f32.partialorder %v488, 0.0
    %v506 = vmul.f32 %v379, 0.2
    %v507 = vmul.f32 %v381, 0.2
    %v508 = vmul.f32 %v468, 0.2
    %v509 = vmul.f32 %v470, 0.2
    %v510 = vmul.f32 %v385, 0.2
    %v511 = vmul.f32 %v387, 0.2
    %v512 = vmul.f32 %v474, 0.2
    %v513 = vmul.f32 %v476, 0.2
    %v514 = vmul.f32 %v391, 0.2
    %v515 = vmul.f32 %v393, 0.2
    %v516 = vmul.f32 %v480, 0.2
    %v517 = vmul.f32 %v482, 0.2
    %v518 = vmul.f32 %v397, 0.2
    %v519 = vmul.f32 %v399, 0.2
    %v520 = vmul.f32 %v486, 0.2
    %v521 = vmul.f32 %v488, 0.2
    %v522 = vsel %vm490, %v379, %v506
    %v523 = vsel %vm491, %v381, %v507
    %v524 = vsel %vm492, %v468, %v508
    %v525 = vsel %vm493, %v470, %v509
    %v526 = vsel %vm494, %v385, %v510
    %v527 = vsel %vm495, %v387, %v511
    %v528 = vsel %vm496, %v474, %v512
    %v529 = vsel %vm497, %v476, %v513
    %v530 = vsel %vm498, %v391, %v514
    %v531 = vsel %vm499, %v393, %v515
    %v532 = vsel %vm500, %v480, %v516
    %v533 = vsel %vm501, %v482, %v517
    %v534 = vsel %vm502, %v397, %v518
    %v535 = vsel %vm503, %v399, %v519
    %v536 = vsel %vm504, %v486, %v520
    %v537 = vsel %vm505, %v488, %v521
    %538 = vset.pattern.permute.xlu0 1
    %539 = vperm.xlu0 %538, %v79
    %v540 = vpop.permute.xlu0 %539
    %542 = vset.pattern.permute.xlu0 1
    %543 = vperm.xlu0 %542, %v80
    %v544 = vpop.permute.xlu0 %543
    %546 = vset.pattern.permute.xlu0 1
    %547 = vperm.xlu0 %546, %v81
    %v548 = vpop.permute.xlu0 %547
    %550 = vset.pattern.permute.xlu0 1
    %551 = vperm.xlu0 %550, %v82
    %v552 = vpop.permute.xlu0 %551
    %554 = vrot.lane.b32.xlu0 %v83, 112
    %v555 = vpop.permute.xlu0 %554
    %556 = vrot.lane.b32.xlu0 %v84, 112
    %v557 = vpop.permute.xlu0 %556
    %558 = vrot.lane.b32.xlu0 %v85, 112
    %v559 = vpop.permute.xlu0 %558
    %560 = vrot.lane.b32.xlu0 %v86, 112
    %v561 = vpop.permute.xlu0 %560
    %vm562 = vcmask 261120
    %v563 = vsel %vm562, %v555, 0
    %v565 = vsel %vm562, %v557, 0
    %v567 = vsel %vm562, %v559, 0
    %v569 = vsel %vm562, %v561, 0
    %571 = vmatprep.subr.mxu0 %v523
    %572 = vmatpush1.msra.mxu0 %v522
    %573 = vmatprep.subr.mxu0 %v527
    %574 = vmatpush1.msra.mxu0 %v526
    %575 = vmatprep.subr.mxu0 %v531
    %576 = vmatpush1.msra.mxu0 %v530
    %577 = vmatprep.subr.mxu0 %v535
    %578 = vmatpush1.msra.mxu0 %v534
    %579 = vmatprep.subr.mxu0 0.0
    %580 = vmatpush1.msra.mxu0 0.0
    %581 = vmatprep.subr.mxu0 0.0
    %582 = vmatpush1.msra.mxu0 0.0
    %583 = vmatprep.subr.mxu0 0.0
    %584 = vmatpush1.msra.mxu0 0.0
    %585 = vmatprep.subr.mxu0 0.0
    %586 = vmatpush1.msra.mxu0 0.0
    %587 = vmatprep.subr.mxu0 0.0
    %588 = vmatpush1.msra.mxu0 0.0
    %589 = vmatprep.subr.mxu0 0.0
    %590 = vmatpush1.msra.mxu0 0.0
    %591 = vmatprep.subr.mxu0 0.0
    %592 = vmatpush1.msra.mxu0 0.0
    %593 = vmatprep.subr.mxu0 0.0
    %594 = vmatpush1.msra.mxu0 0.0
    %595 = vmatprep.subr.mxu0 0.0
    %596 = vmatpush1.msra.mxu0 0.0
    %597 = vmatprep.subr.mxu0 0.0
    %598 = vmatpush1.msra.mxu0 0.0
    %599 = vmatprep.subr.mxu0 0.0
    %600 = vmatpush1.msra.mxu0 0.0
    %601 = vmatprep.subr.mxu0 0.0
    %602 = vmatpush1.msra.mxu0 0.0
    %603 = vmatprep.subr.mxu0 0.0
    %604 = vmatpush1.msra.mxu0 0.0
    %605 = vmatprep.subr.mxu0 0.0
    %606 = vmatpush1.msra.mxu0 0.0
    %607 = vmatprep.subr.mxu0 0.0
    %608 = vmatpush1.msra.mxu0 0.0
    %609 = vmatprep.subr.mxu0 0.0
    %610 = vmatpush1.msra.mxu0 0.0
    %611 = vmatprep.subr.mxu0 0.0
    %612 = vmatpush1.msra.mxu0 0.0
    %613 = vmatprep.subr.mxu0 0.0
    %614 = vmatpush1.msra.mxu0 0.0
    %615 = vmatprep.subr.mxu0 0.0
    %616 = vmatpush1.msra.mxu0 0.0
    %617 = vmatprep.subr.mxu0 0.0
    %618 = vmatpush1.msra.mxu0 0.0
    %619 = vmatprep.subr.mxu0 0.0
    %620 = vmatpush1.msra.mxu0 0.0
    %621 = vmatprep.subr.mxu0 0.0
    %622 = vmatpush1.msra.mxu0 0.0
    %623 = vmatprep.subr.mxu0 0.0
    %624 = vmatpush1.msra.mxu0 0.0
    %625 = vmatprep.subr.mxu0 0.0
    %626 = vmatpush1.msra.mxu0 0.0
    %627 = vmatprep.subr.mxu0 0.0
    %628 = vmatpush1.msra.mxu0 0.0
    %629 = vmatprep.subr.mxu0 0.0
    %630 = vmatpush1.msra.mxu0 0.0
    %631 = vmatprep.subr.mxu0 0.0
    %632 = vmatpush1.msra.mxu0 0.0
    %633 = vmatprep.subr.mxu0 0.0
    %634 = vmatpush1.msra.mxu0 0.0
    %635 = vmatprep.mubr.f32.mxu0 0.0
    %636 = vmatmul.mubr.f32.gmra.mrb[0].mxu0 %v563
    %v637 = vpop.f32.mrb[0].mxu0
    %v638 = vadd.f32 %v540, %v637
    %v639 = vpop.f32.mrb[0].mxu0
    %v640 = vadd.f32 %v540, %v639
    %641 = vmatprep.mubr.f32.mxu0 0.0
    %642 = vmatmul.mubr.f32.gmra.mrb[0].mxu0 %v565
    %v643 = vpop.f32.mrb[0].mxu0
    %v644 = vadd.f32 %v544, %v643
    %v645 = vpop.f32.mrb[0].mxu0
    %v646 = vadd.f32 %v544, %v645
    %647 = vmatprep.mubr.f32.mxu0 0.0
    %648 = vmatmul.mubr.f32.gmra.mrb[0].mxu0 %v567
    %v649 = vpop.f32.mrb[0].mxu0
    %v650 = vadd.f32 %v548, %v649
    %v651 = vpop.f32.mrb[0].mxu0
    %v652 = vadd.f32 %v548, %v651
    %653 = vmatprep.mubr.f32.mxu0 0.0
    %654 = vmatmul.mubr.f32.gmra.mrb[0].mxu0 %v569
    %v655 = vpop.f32.mrb[0].mxu0
    %v656 = vadd.f32 %v552, %v655
    %v657 = vpop.f32.mrb[0].mxu0
    %v658 = vadd.f32 %v552, %v657
    %659 = vdwg.mxu0
    %660 = vmatprep.subr.mxu0 %v525
    %661 = vmatpush1.msra.mxu0 %v524
    %662 = vmatprep.subr.mxu0 %v529
    %663 = vmatpush1.msra.mxu0 %v528
    %664 = vmatprep.subr.mxu0 %v533
    %665 = vmatpush1.msra.mxu0 %v532
    %666 = vmatprep.subr.mxu0 %v537
    %667 = vmatpush1.msra.mxu0 %v536
    %668 = vmatprep.subr.mxu0 0.0
    %669 = vmatpush1.msra.mxu0 0.0
    %670 = vmatprep.subr.mxu0 0.0
    %671 = vmatpush1.msra.mxu0 0.0
    %672 = vmatprep.subr.mxu0 0.0
    %673 = vmatpush1.msra.mxu0 0.0
    %674 = vmatprep.subr.mxu0 0.0
    %675 = vmatpush1.msra.mxu0 0.0
    %676 = vmatprep.subr.mxu0 0.0
    %677 = vmatpush1.msra.mxu0 0.0
    %678 = vmatprep.subr.mxu0 0.0
    %679 = vmatpush1.msra.mxu0 0.0
    %680 = vmatprep.subr.mxu0 0.0
    %681 = vmatpush1.msra.mxu0 0.0
    %682 = vmatprep.subr.mxu0 0.0
    %683 = vmatpush1.msra.mxu0 0.0
    %684 = vmatprep.subr.mxu0 0.0
    %685 = vmatpush1.msra.mxu0 0.0
    %686 = vmatprep.subr.mxu0 0.0
    %687 = vmatpush1.msra.mxu0 0.0
    %688 = vmatprep.subr.mxu0 0.0
    %689 = vmatpush1.msra.mxu0 0.0
    %690 = vmatprep.subr.mxu0 0.0
    %691 = vmatpush1.msra.mxu0 0.0
    %692 = vmatprep.subr.mxu0 0.0
    %693 = vmatpush1.msra.mxu0 0.0
    %694 = vmatprep.subr.mxu0 0.0
    %695 = vmatpush1.msra.mxu0 0.0
    %696 = vmatprep.subr.mxu0 0.0
    %697 = vmatpush1.msra.mxu0 0.0
    %698 = vmatprep.subr.mxu0 0.0
    %699 = vmatpush1.msra.mxu0 0.0
    %700 = vmatprep.subr.mxu0 0.0
    %701 = vmatpush1.msra.mxu0 0.0
    %702 = vmatprep.subr.mxu0 0.0
    %703 = vmatpush1.msra.mxu0 0.0
    %704 = vmatprep.subr.mxu0 0.0
    %705 = vmatpush1.msra.mxu0 0.0
    %706 = vmatprep.subr.mxu0 0.0
    %707 = vmatpush1.msra.mxu0 0.0
    %708 = vmatprep.subr.mxu0 0.0
    %709 = vmatpush1.msra.mxu0 0.0
    %710 = vmatprep.subr.mxu0 0.0
    %711 = vmatpush1.msra.mxu0 0.0
    %712 = vmatprep.subr.mxu0 0.0
    %713 = vmatpush1.msra.mxu0 0.0
    %714 = vmatprep.subr.mxu0 0.0
    %715 = vmatpush1.msra.mxu0 0.0
    %716 = vmatprep.subr.mxu0 0.0
    %717 = vmatpush1.msra.mxu0 0.0
    %718 = vmatprep.subr.mxu0 0.0
    %719 = vmatpush1.msra.mxu0 0.0
    %720 = vmatprep.subr.mxu0 0.0
    %721 = vmatpush1.msra.mxu0 0.0
    %722 = vmatprep.subr.mxu0 0.0
    %723 = vmatpush1.msra.mxu0 0.0
    %724 = vmatprep.mubr.f32.mxu0 0.0
    %725 = vmatmul.mubr.f32.gmra.mrb[0].mxu0 %v563
    %v726 = vpop.f32.mrb[0].mxu0
    %v727 = vadd.f32 %v540, %v726
    %v728 = vpop.f32.mrb[0].mxu0
    %v729 = vadd.f32 %v540, %v728
    %730 = vmatprep.mubr.f32.mxu0 0.0
    %731 = vmatmul.mubr.f32.gmra.mrb[0].mxu0 %v565
    %v732 = vpop.f32.mrb[0].mxu0
    %v733 = vadd.f32 %v544, %v732
    %v734 = vpop.f32.mrb[0].mxu0
    %v735 = vadd.f32 %v544, %v734
    %736 = vmatprep.mubr.f32.mxu0 0.0
    %737 = vmatmul.mubr.f32.gmra.mrb[0].mxu0 %v567
    %v738 = vpop.f32.mrb[0].mxu0
    %v739 = vadd.f32 %v548, %v738
    %v740 = vpop.f32.mrb[0].mxu0
    %v741 = vadd.f32 %v548, %v740
    %742 = vmatprep.mubr.f32.mxu0 0.0
    %743 = vmatmul.mubr.f32.gmra.mrb[0].mxu0 %v569
    %v744 = vpop.f32.mrb[0].mxu0
    %v745 = vadd.f32 %v552, %v744
    %v746 = vpop.f32.mrb[0].mxu0
    %v747 = vadd.f32 %v552, %v746
    %748 = vdwg.mxu0
    %vm749 = vcmp.gt.f32.partialorder %v638, 0.0
    %vm750 = vcmp.gt.f32.partialorder %v640, 0.0
    %vm751 = vcmp.gt.f32.partialorder %v727, 0.0
    %vm752 = vcmp.gt.f32.partialorder %v729, 0.0
    %vm753 = vcmp.gt.f32.partialorder %v644, 0.0
    %vm754 = vcmp.gt.f32.partialorder %v646, 0.0
    %vm755 = vcmp.gt.f32.partialorder %v733, 0.0
    %vm756 = vcmp.gt.f32.partialorder %v735, 0.0
    %vm757 = vcmp.gt.f32.partialorder %v650, 0.0
    %vm758 = vcmp.gt.f32.partialorder %v652, 0.0
    %vm759 = vcmp.gt.f32.partialorder %v739, 0.0
    %vm760 = vcmp.gt.f32.partialorder %v741, 0.0
    %vm761 = vcmp.gt.f32.partialorder %v656, 0.0
    %vm762 = vcmp.gt.f32.partialorder %v658, 0.0
    %vm763 = vcmp.gt.f32.partialorder %v745, 0.0
    %vm764 = vcmp.gt.f32.partialorder %v747, 0.0
    %v765 = vmul.f32 %v638, 0.2
    %v766 = vmul.f32 %v640, 0.2
    %v767 = vmul.f32 %v727, 0.2
    %v768 = vmul.f32 %v729, 0.2
    %v769 = vmul.f32 %v644, 0.2
    %v770 = vmul.f32 %v646, 0.2
    %v771 = vmul.f32 %v733, 0.2
    %v772 = vmul.f32 %v735, 0.2
    %v773 = vmul.f32 %v650, 0.2
    %v774 = vmul.f32 %v652, 0.2
    %v775 = vmul.f32 %v739, 0.2
    %v776 = vmul.f32 %v741, 0.2
    %v777 = vmul.f32 %v656, 0.2
    %v778 = vmul.f32 %v658, 0.2
    %v779 = vmul.f32 %v745, 0.2
    %v780 = vmul.f32 %v747, 0.2
    %v781 = vsel %vm749, %v638, %v765
    %v782 = vsel %vm750, %v640, %v766
    %v783 = vsel %vm751, %v727, %v767
    %v784 = vsel %vm752, %v729, %v768
    %v785 = vsel %vm753, %v644, %v769
    %v786 = vsel %vm754, %v646, %v770
    %v787 = vsel %vm755, %v733, %v771
    %v788 = vsel %vm756, %v735, %v772
    %v789 = vsel %vm757, %v650, %v773
    %v790 = vsel %vm758, %v652, %v774
    %v791 = vsel %vm759, %v739, %v775
    %v792 = vsel %vm760, %v741, %v776
    %v793 = vsel %vm761, %v656, %v777
    %v794 = vsel %vm762, %v658, %v778
    %v795 = vsel %vm763, %v745, %v779
    %v796 = vsel %vm764, %v747, %v780
    %797 = vset.pattern.permute.xlu0 2
    %798 = vperm.xlu0 %797, %v79
    %v799 = vpop.permute.xlu0 %798
    %801 = vset.pattern.permute.xlu0 2
    %802 = vperm.xlu0 %801, %v80
    %v803 = vpop.permute.xlu0 %802
    %805 = vrot.lane.b32.xlu0 %v83, 80
    %v806 = vpop.permute.xlu0 %805
    %807 = vrot.lane.b32.xlu0 %v84, 80
    %v808 = vpop.permute.xlu0 %807
    %809 = vrot.lane.b32.xlu0 %v85, 80
    %v810 = vpop.permute.xlu0 %809
    %811 = vrot.lane.b32.xlu0 %v86, 80
    %v812 = vpop.permute.xlu0 %811
    %817 = vxpose.xlu0.b32.start [1/16] %v806, 128
    %818 = vxpose.xlu0.b32.cont [2/16] %v808, 128
    %819 = vxpose.xlu0.b32.cont [3/16] %v810, 128
    %820 = vxpose.xlu0.b32.cont [4/16] %v812, 128
    %821 = vxpose.xlu0.b32.cont [5/16] 0.0, 128
    %822 = vxpose.xlu0.b32.cont [6/16] 0.0, 128
    %823 = vxpose.xlu0.b32.cont [7/16] 0.0, 128
    %824 = vxpose.xlu0.b32.cont [8/16] 0.0, 128
    %825 = vxpose.xlu0.b32.cont [9/16] 0.0, 128
    %826 = vxpose.xlu0.b32.cont [10/16] 0.0, 128
    %827 = vxpose.xlu0.b32.cont [11/16] 0.0, 128
    %828 = vxpose.xlu0.b32.cont [12/16] 0.0, 128
    %829 = vxpose.xlu0.b32.cont [13/16] 0.0, 128
    %830 = vxpose.xlu0.b32.cont [14/16] 0.0, 128
    %831 = vxpose.xlu0.b32.cont [15/16] 0.0, 128
    %832 = vxpose.xlu0.b32.end [16/16] 0.0, 128
    %v833 = vpop.trf.xlu0
    %v834 = vpop.trf.xlu0
    %v835 = vpop.trf.xlu0
    %v836 = vpop.trf.xlu0
    %v837 = vpop.trf.xlu0
    %v838 = vpop.trf.xlu0
    %v839 = vpop.trf.xlu0
    %v840 = vpop.trf.xlu0
    %v841 = vpop.trf.xlu0
    %v842 = vpop.trf.xlu0
    %v843 = vpop.trf.xlu0
    %v844 = vpop.trf.xlu0
    %v845 = vpop.trf.xlu0
    %v846 = vpop.trf.xlu0
    %v847 = vpop.trf.xlu0
    %v848 = vpop.trf.xlu0
    %v850 = vsel %vm562, %v833, 0
    %v853 = vsel %vm562, %v834, 0
    %855 = vmatprep.subr.mxu0 %v782
    %856 = vmatpush1.msra.mxu0 %v781
    %857 = vmatprep.subr.mxu0 %v786
    %858 = vmatpush1.msra.mxu0 %v785
    %859 = vmatprep.subr.mxu0 %v790
    %860 = vmatpush1.msra.mxu0 %v789
    %861 = vmatprep.subr.mxu0 %v794
    %862 = vmatpush1.msra.mxu0 %v793
    %863 = vmatprep.subr.mxu0 0.0
    %864 = vmatpush1.msra.mxu0 0.0
    %865 = vmatprep.subr.mxu0 0.0
    %866 = vmatpush1.msra.mxu0 0.0
    %867 = vmatprep.subr.mxu0 0.0
    %868 = vmatpush1.msra.mxu0 0.0
    %869 = vmatprep.subr.mxu0 0.0
    %870 = vmatpush1.msra.mxu0 0.0
    %871 = vmatprep.subr.mxu0 0.0
    %872 = vmatpush1.msra.mxu0 0.0
    %873 = vmatprep.subr.mxu0 0.0
    %874 = vmatpush1.msra.mxu0 0.0
    %875 = vmatprep.subr.mxu0 0.0
    %876 = vmatpush1.msra.mxu0 0.0
    %877 = vmatprep.subr.mxu0 0.0
    %878 = vmatpush1.msra.mxu0 0.0
    %879 = vmatprep.subr.mxu0 0.0
    %880 = vmatpush1.msra.mxu0 0.0
    %881 = vmatprep.subr.mxu0 0.0
    %882 = vmatpush1.msra.mxu0 0.0
    %883 = vmatprep.subr.mxu0 0.0
    %884 = vmatpush1.msra.mxu0 0.0
    %885 = vmatprep.subr.mxu0 0.0
    %886 = vmatpush1.msra.mxu0 0.0
    %887 = vmatprep.subr.mxu0 0.0
    %888 = vmatpush1.msra.mxu0 0.0
    %889 = vmatprep.subr.mxu0 0.0
    %890 = vmatpush1.msra.mxu0 0.0
    %891 = vmatprep.subr.mxu0 0.0
    %892 = vmatpush1.msra.mxu0 0.0
    %893 = vmatprep.subr.mxu0 0.0
    %894 = vmatpush1.msra.mxu0 0.0
    %895 = vmatprep.subr.mxu0 0.0
    %896 = vmatpush1.msra.mxu0 0.0
    %897 = vmatprep.subr.mxu0 0.0
    %898 = vmatpush1.msra.mxu0 0.0
    %899 = vmatprep.subr.mxu0 0.0
    %900 = vmatpush1.msra.mxu0 0.0
    %901 = vmatprep.subr.mxu0 0.0
    %902 = vmatpush1.msra.mxu0 0.0
    %903 = vmatprep.subr.mxu0 0.0
    %904 = vmatpush1.msra.mxu0 0.0
    %905 = vmatprep.subr.mxu0 0.0
    %906 = vmatpush1.msra.mxu0 0.0
    %907 = vmatprep.subr.mxu0 0.0
    %908 = vmatpush1.msra.mxu0 0.0
    %909 = vmatprep.subr.mxu0 0.0
    %910 = vmatpush1.msra.mxu0 0.0
    %911 = vmatprep.subr.mxu0 0.0
    %912 = vmatpush1.msra.mxu0 0.0
    %913 = vmatprep.subr.mxu0 0.0
    %914 = vmatpush1.msra.mxu0 0.0
    %915 = vmatprep.subr.mxu0 0.0
    %916 = vmatpush1.msra.mxu0 0.0
    %917 = vmatprep.subr.mxu0 0.0
    %918 = vmatpush1.msra.mxu0 0.0
    %919 = vmatprep.mubr.f32.mxu0 0.0
    %920 = vmatmul.mubr.f32.gmra.mrb[0].mxu0 %v850
    %v921 = vpop.f32.mrb[0].mxu0
    %v922 = vadd.f32 %v799, %v921
    %v923 = vpop.f32.mrb[0].mxu0
    %v924 = vadd.f32 %v799, %v923
    %925 = vmatprep.mubr.f32.mxu0 0.0
    %926 = vmatmul.mubr.f32.gmra.mrb[0].mxu0 %v853
    %v927 = vpop.f32.mrb[0].mxu0
    %v928 = vadd.f32 %v803, %v927
    %v929 = vpop.f32.mrb[0].mxu0
    %v930 = vadd.f32 %v803, %v929
    %931 = vdwg.mxu0
    %932 = vmatprep.subr.mxu0 %v784
    %933 = vmatpush1.msra.mxu0 %v783
    %934 = vmatprep.subr.mxu0 %v788
    %935 = vmatpush1.msra.mxu0 %v787
    %936 = vmatprep.subr.mxu0 %v792
    %937 = vmatpush1.msra.mxu0 %v791
    %938 = vmatprep.subr.mxu0 %v796
    %939 = vmatpush1.msra.mxu0 %v795
    %940 = vmatprep.subr.mxu0 0.0
    %941 = vmatpush1.msra.mxu0 0.0
    %942 = vmatprep.subr.mxu0 0.0
    %943 = vmatpush1.msra.mxu0 0.0
    %944 = vmatprep.subr.mxu0 0.0
    %945 = vmatpush1.msra.mxu0 0.0
    %946 = vmatprep.subr.mxu0 0.0
    %947 = vmatpush1.msra.mxu0 0.0
    %948 = vmatprep.subr.mxu0 0.0
    %949 = vmatpush1.msra.mxu0 0.0
    %950 = vmatprep.subr.mxu0 0.0
    %951 = vmatpush1.msra.mxu0 0.0
    %952 = vmatprep.subr.mxu0 0.0
    %953 = vmatpush1.msra.mxu0 0.0
    %954 = vmatprep.subr.mxu0 0.0
    %955 = vmatpush1.msra.mxu0 0.0
    %956 = vmatprep.subr.mxu0 0.0
    %957 = vmatpush1.msra.mxu0 0.0
    %958 = vmatprep.subr.mxu0 0.0
    %959 = vmatpush1.msra.mxu0 0.0
    %960 = vmatprep.subr.mxu0 0.0
    %961 = vmatpush1.msra.mxu0 0.0
    %962 = vmatprep.subr.mxu0 0.0
    %963 = vmatpush1.msra.mxu0 0.0
    %964 = vmatprep.subr.mxu0 0.0
    %965 = vmatpush1.msra.mxu0 0.0
    %966 = vmatprep.subr.mxu0 0.0
    %967 = vmatpush1.msra.mxu0 0.0
    %968 = vmatprep.subr.mxu0 0.0
    %969 = vmatpush1.msra.mxu0 0.0
    %970 = vmatprep.subr.mxu0 0.0
    %971 = vmatpush1.msra.mxu0 0.0
    %972 = vmatprep.subr.mxu0 0.0
    %973 = vmatpush1.msra.mxu0 0.0
    %974 = vmatprep.subr.mxu0 0.0
    %975 = vmatpush1.msra.mxu0 0.0
    %976 = vmatprep.subr.mxu0 0.0
    %977 = vmatpush1.msra.mxu0 0.0
    %978 = vmatprep.subr.mxu0 0.0
    %979 = vmatpush1.msra.mxu0 0.0
    %980 = vmatprep.subr.mxu0 0.0
    %981 = vmatpush1.msra.mxu0 0.0
    %982 = vmatprep.subr.mxu0 0.0
    %983 = vmatpush1.msra.mxu0 0.0
    %984 = vmatprep.subr.mxu0 0.0
    %985 = vmatpush1.msra.mxu0 0.0
    %986 = vmatprep.subr.mxu0 0.0
    %987 = vmatpush1.msra.mxu0 0.0
    %988 = vmatprep.subr.mxu0 0.0
    %989 = vmatpush1.msra.mxu0 0.0
    %990 = vmatprep.subr.mxu0 0.0
    %991 = vmatpush1.msra.mxu0 0.0
    %992 = vmatprep.subr.mxu0 0.0
    %993 = vmatpush1.msra.mxu0 0.0
    %994 = vmatprep.subr.mxu0 0.0
    %995 = vmatpush1.msra.mxu0 0.0
    %996 = vmatprep.mubr.f32.mxu0 0.0
    %997 = vmatmul.mubr.f32.gmra.mrb[0].mxu0 %v850
    %v998 = vpop.f32.mrb[0].mxu0
    %v999 = vadd.f32 %v799, %v998
    %v1000 = vpop.f32.mrb[0].mxu0
    %v1001 = vadd.f32 %v799, %v1000
    %1002 = vmatprep.mubr.f32.mxu0 0.0
    %1003 = vmatmul.mubr.f32.gmra.mrb[0].mxu0 %v853
    %v1004 = vpop.f32.mrb[0].mxu0
    %v1005 = vadd.f32 %v803, %v1004
    %v1006 = vpop.f32.mrb[0].mxu0
    %v1007 = vadd.f32 %v803, %v1006
    %1008 = vdwg.mxu0
    %vm1009 = vcmp.gt.f32.partialorder %v922, 0.0
    %vm1010 = vcmp.gt.f32.partialorder %v924, 0.0
    %vm1011 = vcmp.gt.f32.partialorder %v999, 0.0
    %vm1012 = vcmp.gt.f32.partialorder %v1001, 0.0
    %vm1013 = vcmp.gt.f32.partialorder %v928, 0.0
    %vm1014 = vcmp.gt.f32.partialorder %v930, 0.0
    %vm1015 = vcmp.gt.f32.partialorder %v1005, 0.0
    %vm1016 = vcmp.gt.f32.partialorder %v1007, 0.0
    %v1017 = vmul.f32 %v922, 0.2
    %v1018 = vmul.f32 %v924, 0.2
    %v1019 = vmul.f32 %v999, 0.2
    %v1020 = vmul.f32 %v1001, 0.2
    %v1021 = vmul.f32 %v928, 0.2
    %v1022 = vmul.f32 %v930, 0.2
    %v1023 = vmul.f32 %v1005, 0.2
    %v1024 = vmul.f32 %v1007, 0.2
    %v1025 = vsel %vm1009, %v922, %v1017
    %v1026 = vsel %vm1010, %v924, %v1018
    %v1027 = vsel %vm1011, %v999, %v1019
    %v1028 = vsel %vm1012, %v1001, %v1020
    %v1029 = vsel %vm1013, %v928, %v1021
    %v1030 = vsel %vm1014, %v930, %v1022
    %v1031 = vsel %vm1015, %v1005, %v1023
    %v1032 = vsel %vm1016, %v1007, %v1024
    %1033 = vset.pattern.permute.xlu0 3
    %1034 = vperm.xlu0 %1033, %v79
    %v1035 = vpop.permute.xlu0 %1034
    %1037 = vset.pattern.permute.xlu0 3
    %1038 = vperm.xlu0 %1037, %v80
    %v1039 = vpop.permute.xlu0 %1038
    %v1041 = vmul.f32 %v1025, %v1035
    %v1042 = vmul.f32 %v1026, %v1035
    %v1043 = vmul.f32 %v1027, %v1035
    %v1044 = vmul.f32 %v1028, %v1035
    %v1045 = vmul.f32 %v1029, %v1039
    %v1046 = vmul.f32 %v1030, %v1039
    %v1047 = vmul.f32 %v1031, %v1039
    %v1048 = vmul.f32 %v1032, %v1039
    %v1049 = vadd.f32 %v1041, %v1045
    %v1050 = vrot.slane %v1049, 4
    %v1051 = vadd.f32 %v1049, %v1050
    %v1052 = vrot.slane %v1051, 2
    %v1053 = vadd.f32 %v1051, %v1052
    %v1054 = vrot.slane %v1053, 1
    %v1055 = vadd.f32 %v1053, %v1054
    %v1056 = vadd.f32 %v1042, %v1046
    %v1057 = vrot.slane %v1056, 4
    %v1058 = vadd.f32 %v1056, %v1057
    %v1059 = vrot.slane %v1058, 2
    %v1060 = vadd.f32 %v1058, %v1059
    %v1061 = vrot.slane %v1060, 1
    %v1062 = vadd.f32 %v1060, %v1061
    %v1063 = vadd.f32 %v1043, %v1047
    %v1064 = vrot.slane %v1063, 4
    %v1065 = vadd.f32 %v1063, %v1064
    %v1066 = vrot.slane %v1065, 2
    %v1067 = vadd.f32 %v1065, %v1066
    %v1068 = vrot.slane %v1067, 1
    %v1069 = vadd.f32 %v1067, %v1068
    %v1070 = vadd.f32 %v1044, %v1048
    %v1071 = vrot.slane %v1070, 4
    %v1072 = vadd.f32 %v1070, %v1071
    %v1073 = vrot.slane %v1072, 2
    %v1074 = vadd.f32 %v1072, %v1073
    %v1075 = vrot.slane %v1074, 1
    %v1076 = vadd.f32 %v1074, %v1075
    %1077 = vset.pattern.permute.xlu0 4
    %1078 = vperm.xlu0 %1077, %v79
    %v1079 = vpop.permute.xlu0 %1078
    %v1081 = vadd.f32 %v1055, %v1079
    %v1082 = vadd.f32 %v1062, %v1079
    %v1083 = vadd.f32 %v1069, %v1079
    %v1084 = vadd.f32 %v1076, %v1079
    %v1085 = vand.u32 2147483647, %v1081
    %v1086 = vand.u32 2147483647, %v1082
    %v1087 = vand.u32 2147483647, %v1083
    %v1088 = vand.u32 2147483647, %v1084
    %v1089 = vsub.f32 0.0, %v1085
    %v1090 = vsub.f32 0.0, %v1086
    %v1091 = vsub.f32 0.0, %v1087
    %v1092 = vsub.f32 0.0, %v1088
    %v1093 = vmul.f32 %v1089, 1.442695
    %v1094 = vpow.pop %v1093
    %v1095 = vmul.f32 %v1090, 1.442695
    %v1096 = vpow.pop %v1095
    %v1097 = vmul.f32 %v1091, 1.442695
    %v1098 = vpow.pop %v1097
    %v1099 = vmul.f32 %v1092, 1.442695
    %v1100 = vpow.pop %v1099
    %v1101 = vadd.f32 %v1094, 1.0
    %v1102 = vadd.f32 %v1096, 1.0
    %v1103 = vadd.f32 %v1098, 1.0
    %v1104 = vadd.f32 %v1100, 1.0
    %v1105 = vrcp.pop %v1101
    %v1106 = vmul.f32 1.0, %v1105
    %v1107 = vrcp.pop %v1102
    %v1108 = vmul.f32 1.0, %v1107
    %v1109 = vrcp.pop %v1103
    %v1110 = vmul.f32 1.0, %v1109
    %v1111 = vrcp.pop %v1104
    %v1112 = vmul.f32 1.0, %v1111
    %vm1113 = vcmp.ge.f32.partialorder %v1081, 0.0
    %vm1114 = vcmp.ge.f32.partialorder %v1082, 0.0
    %vm1115 = vcmp.ge.f32.partialorder %v1083, 0.0
    %vm1116 = vcmp.ge.f32.partialorder %v1084, 0.0
    %v1117 = vmul.f32 %v1094, %v1106
    %v1118 = vmul.f32 %v1096, %v1108
    %v1119 = vmul.f32 %v1098, %v1110
    %v1120 = vmul.f32 %v1100, %v1112
    %v1121 = vsel %vm1113, %v1106, %v1117
    %v1122 = vsel %vm1114, %v1108, %v1118
    %v1123 = vsel %vm1115, %v1110, %v1119
    %v1124 = vsel %vm1116, %v1112, %v1120
    %v1129 = vcombine.low %v1121, %v1122
    %v1130 = vcombine.low %v1123, %v1124
    %v1132 = vunpack.c.l.s4 1966171168
    %v1133 = vunpack.c.0.s8 %v1132
    %v1134 = vlaneseq
    %v1135 = vshrl.u32 %v1134, 7
    %v1136 = vsub.s32 %v1133, %v1135
    %v1137 = vrot.slane %v1129, %v1136
    %v1139 = vunpack.c.l.s4 1966171168
    %v1140 = vunpack.c.0.s8 %v1139
    %v1141 = vlaneseq
    %v1142 = vshrl.u32 %v1141, 7
    %v1143 = vsub.s32 %v1140, %v1142
    %v1144 = vrot.slane %v1130, %v1143
    %v1145 = vcombine.low %v1137, %v1144
    %v1147 = vunpack.c.l.s4 1966171168
    %v1148 = vunpack.c.0.s8 %v1147
    %v1149 = vlaneseq
    %v1150 = vshrl.u32 %v1149, 7
    %v1151 = vsub.s32 %v1148, %v1150
    %v1152 = vrot.slane %v1145, %v1151
    %v1154 = vlaneseq
    %vm1155 = vcmp.ge.s32.totalorder %v1154, 0
    %vm1156 = vcmp.lt.s32.totalorder %v1154, 512
    %vm1157 = vmand %vm1155, %vm1156
    %1158 = vst.msk [vmem:[#allocation2] sm:$0xf] %vm1157, %v1152
    // Predicated region
    $region14: #{discriminator_forward.1} parent=1 // pred_check
      _
    $region15: #{discriminator_forward.1} parent=1 // pred_check_branch
      %1160 = sbr.rel (0) target = $region17
    $region16: #{discriminator_forward.1} parent=1 // pred_region
      %s1162 = ssub.s32 64, 64
      %1163 = vsyncadd [#allocation3], %s1162
      %s1165 = sshll.u32 [#allocation2], 4
      %s1166 = int_to_ptr.vmem [resolvable:$true] %s1165
      %1168 = dma.vmem_to_hbm [thread:$0]  %s1166, 64, %s3, [#allocation3]
    $region17: #{discriminator_forward.1} parent=1 // pred_fallthru
      _
    // Predicated region
    $region18: #{discriminator_forward.1} parent=1 // pred_check
      _
    $region19: #{discriminator_forward.1} parent=1 // pred_check_branch
      %1170 = sbr.rel (0) target = $region21
    $region20: #{discriminator_forward.1} parent=1 // pred_region
      %1171 = dma.done [#allocation3], 64
    $region21: #{discriminator_forward.1} parent=1 // pred_fallthru
      _
    %1172 = vsyncpa [#allocation3], 1

</llo_original>
